<compile_context>
chip_gen: v7x
topology: tpu7x:2x2x1
jax: 0.10.0
libtpu: 0.0.40
codegen_flags: <defaults>
</compile_context>

<pallas_src>
import functools

import jax
import jax.numpy as jnp
from jax.experimental import pallas as pl
from jax.experimental.pallas import tpu as pltpu


def _enc_kernel(x_ref, w_ref, shift_ref, o_ref):
    """One (tm, tn) output tile: full-D MXU dot, fused BN-shift + tanh epilogue."""
    # X is DMA'd as f32 (no materialized bf16 copy in HBM); cast on the VPU.
    x = x_ref[...].astype(jnp.bfloat16)
    y = jnp.dot(x, w_ref[...], preferred_element_type=jnp.float32)
    y = y + shift_ref[...]                         # BN shift (scale folded into W)
    o_ref[...] = jnp.tanh(y).astype(o_ref.dtype)   # f32 epilogue; cast only on store


def _round_up(x, m):
    return ((x + m - 1) // m) * m


# Conservative VMEM budget for the double-buffered working set: fits v7x's
# 64 MiB per-TensorCore VMEM with headroom; still yields tm=1024 for realistic
# open-unmix shapes (D ~ 3k, H = 512) on every generation.
_VMEM_BUDGET = 36 << 20
_VMEM_LIMIT_CAP = 56 << 20


def _select_tiles(N, D, H_pad, out_bytes, tm_max=1024):
    # tn: keep W grid-invariant (single j block => W is DMA'd once, never
    # re-streamed per M block) whenever double-buffered bf16 W fits half the
    # budget; otherwise fall back to lane-dense 512-wide column tiles.
    if H_pad <= 512 or 2 * D * H_pad * 2 <= _VMEM_BUDGET // 2:
        tn = H_pad
    else:
        tn = 512

    # tm: largest MXU-friendly row tile whose double-buffered f32 X + out tiles
    # fit the remaining budget.
    rem = _VMEM_BUDGET - 2 * D * tn * 2 - 2 * tn * 4
    per_row = 2 * (D * 4 + tn * out_bytes)
    tm_fit = max(rem // per_row, 16)
    tm = min(tm_max, tm_fit)
    if tm >= 256:
        tm = (tm // 256) * 256            # multiples of the MXU dimension
    else:
        tm = max((tm // 16) * 16, 16)     # at least bf16-sublane aligned

    # No padding of N to a tile multiple: cap tm by the rows actually needed
    # (the ragged last M block is masked by Pallas).
    tm = min(tm, _round_up(N, 16))
    # Guarantee >= 2 M blocks when there is enough work so the "parallel"
    # M axis can shard across both TensorCores on v7x.
    if N >= 512:
        tm = min(tm, _round_up((N + 1) // 2, 256))
    tm = max((tm // 16) * 16, 16)
    return tm, tn


@functools.partial(jax.jit, static_argnames=("out_dtype",))
def instrument_backbone_enc(x2d, w_scaled, shift, *, out_dtype=jnp.float32):
    """x2d: (N, D); w_scaled: (D, H) with BN scale pre-folded; shift: (1, H).
    Returns (N, H) out_dtype == tanh(x2d @ w_scaled + shift)."""
    N, D = x2d.shape
    _, H = w_scaled.shape

    H_pad = _round_up(H, 128)
    out_bytes = jnp.dtype(out_dtype).itemsize
    tm, tn = _select_tiles(N, D, H_pad, out_bytes)

    # W / shift are small and reused across all rows: pad their H dim to a lane
    # multiple and cast W to bf16 once.  X is NOT padded or pre-cast -- no extra
    # HBM pass over the large operand; the bf16 cast happens in-kernel.
    w_p = w_scaled
    s_p = shift
    if H_pad != H:
        w_p = jnp.pad(w_p, ((0, 0), (0, H_pad - H)))
        s_p = jnp.pad(s_p, ((0, 0), (0, H_pad - H)))
    w_p = w_p.astype(jnp.bfloat16)
    s_p = s_p.astype(jnp.float32)

    grid = (pl.cdiv(N, tm), pl.cdiv(H_pad, tn))

    # Double-buffered working set -> explicit, generation-safe scoped-VMEM limit.
    ws = 2 * (tm * D * 4 + D * tn * 2 + tn * 4 + tm * tn * out_bytes)
    vmem_limit = min(int(1.25 * ws) + (4 << 20), _VMEM_LIMIT_CAP)

    cost = pl.CostEstimate(
        flops=2 * N * D * H_pad,
        bytes_accessed=N * D * 4 + D * H_pad * 2 + N * H_pad * out_bytes + H_pad * 4,
        transcendentals=N * H_pad,
    )

    out = pl.pallas_call(
        _enc_kernel,
        out_shape=jax.ShapeDtypeStruct((N, H_pad), out_dtype),
        grid_spec=pltpu.PrefetchScalarGridSpec(
            num_scalar_prefetch=0,
            grid=grid,
            in_specs=[
                pl.BlockSpec((tm, D), lambda i, j: (i, 0)),   # X rows, full-D
                pl.BlockSpec((D, tn), lambda i, j: (0, j)),   # W (full-D, bf16)
                pl.BlockSpec((1, tn), lambda i, j: (0, j)),   # BN shift
            ],
            out_specs=pl.BlockSpec((tm, tn), lambda i, j: (i, j)),
        ),
        compiler_params=pltpu.CompilerParams(
            dimension_semantics=("parallel", "parallel"),
            vmem_limit_bytes=vmem_limit,
        ),
        cost_estimate=cost,
    )(x2d, w_p, s_p)

    if H_pad != H:
        out = out[:, :H]
    return out


def run_module(x, shapes, params):
    """Mirror of _InstrumentBackboneEnc.forward.

    x: any shape that flattens to (nb_frames*nb_samples, nb_channels*max_bin)
    shapes: (nb_frames, nb_samples, nb_channels, _)
    """
    nb_frames, nb_samples, nb_channels, _ = shapes
    max_bin = params["max_bin"]
    hidden_size = params["hidden_size"]

    x2d = x.reshape(-1, nb_channels * max_bin)

    # Fold inference-mode BatchNorm1d into per-feature scale/shift; fold the
    # scale into the Linear weight so the kernel epilogue is just `+shift, tanh`.
    # TODO(synk): training-mode BatchNorm (batch stats + running-stat updates)
    # is not implemented; eval()-mode (running-stats) semantics are used.
    eps = 1e-5
    scale = (params["bn_gamma"] / jnp.sqrt(params["bn_var"] + eps)).reshape(1, -1)
    shift = (params["bn_beta"] - params["bn_mean"] * scale[0]).reshape(1, -1)

    w_scaled = params["lin_weight"].T * scale          # (D, H), BN scale folded in

    y2d = instrument_backbone_enc(x2d, w_scaled, shift, out_dtype=jnp.float32)
    return y2d.reshape(nb_frames, nb_samples, hidden_size)


def reference(x, shapes, params):
    nb_frames, nb_samples, nb_channels, _ = shapes
    max_bin = params["max_bin"]
    hidden_size = params["hidden_size"]
    eps = 1e-5
    x2d = x.reshape(-1, nb_channels * max_bin)
    y = x2d @ params["lin_weight"].T
    y = (y - params["bn_mean"]) / jnp.sqrt(params["bn_var"] + eps)
    y = y * params["bn_gamma"] + params["bn_beta"]
    y = jnp.tanh(y)
    return y.reshape(nb_frames, nb_samples, hidden_size)


if __name__ == "__main__":
    # Small shapes consistent with the module's forward:
    nb_frames, nb_samples, nb_channels, nb_bins = 16, 8, 2, 128
    hidden_size = 128

    key = jax.random.PRNGKey(0)
    kx, kw, kg, kb, km, kv = jax.random.split(key, 6)

    # Mixture magnitude spectrogram, (frames, samples, channels, bins)
    x = jax.random.uniform(kx, (nb_frames, nb_samples, nb_channels, nb_bins),
                           dtype=jnp.float32)

    D = nb_channels * nb_bins
    params = {
        "max_bin": nb_bins,
        "hidden_size": hidden_size,
        # nn.Linear(D, hidden_size, bias=False): weight shape (hidden_size, D)
        "lin_weight": (jax.random.normal(kw, (hidden_size, D), jnp.float32)
                       * (1.0 / jnp.sqrt(D))),
        # BatchNorm1d(hidden_size) parameters / running stats (deterministic)
        "bn_gamma": 1.0 + 0.1 * jax.random.normal(kg, (hidden_size,), jnp.float32),
        "bn_beta": 0.1 * jax.random.normal(kb, (hidden_size,), jnp.float32),
        "bn_mean": 0.05 * jax.random.normal(km, (hidden_size,), jnp.float32),
        "bn_var": 1.0 + 0.1 * jax.random.uniform(kv, (hidden_size,), jnp.float32),
    }

    shapes = (nb_frames, nb_samples, nb_channels, nb_bins)

    out = run_module(x, shapes, params)
    out = jax.block_until_ready(out)

    ref = reference(x, shapes, params)
    assert out.shape == (nb_frames, nb_samples, hidden_size)
    # bf16 matmul operands with f32 accumulation -> tolerance looser than pure f32.
    assert jnp.allclose(out, ref, atol=2e-2, rtol=2e-2), "mismatch vs reference"

    print("KERNEL_OK")
</pallas_src>

<mosaic_0001>
module attributes {stable_mosaic.version = 11 : i64} {
  func.func @_enc_kernel(%arg0: i32, %arg1: i32, %arg2: memref<128x256xf32, #tpu.memory_space<vmem>>, %arg3: memref<256x128xbf16, #tpu.memory_space<vmem>>, %arg4: memref<1x128xf32, #tpu.memory_space<vmem>>, %arg5: memref<128x128xf32, #tpu.memory_space<vmem>>) attributes {dimension_semantics = [#tpu.dimension_semantics<parallel>, #tpu.dimension_semantics<parallel>], iteration_bounds = array<i64: 1, 1>, scalar_prefetch = 0 : i64, scratch_operands = 0 : i64, tpu.core_type = #tpu.core_type<tc>, window_params = [{transform_indices = @transform_0, window_bounds = array<i64: 128, 256>}, {transform_indices = @transform_1, window_bounds = array<i64: 256, 128>}, {transform_indices = @transform_2, window_bounds = array<i64: 1, 128>}, {transform_indices = @transform_3, window_bounds = array<i64: 128, 128>}]} {
    %c0 = arith.constant 0 : index
    %c0_0 = arith.constant 0 : index
    %0 = vector.load %arg2[%c0, %c0_0] : memref<128x256xf32, #tpu.memory_space<vmem>>, vector<128x256xf32>
    %1 = arith.truncf %0 : vector<128x256xf32> to vector<128x256xbf16>
    %c0_1 = arith.constant 0 : index
    %c0_2 = arith.constant 0 : index
    %2 = vector.load %arg3[%c0_1, %c0_2] : memref<256x128xbf16, #tpu.memory_space<vmem>>, vector<256x128xbf16>
    %cst = arith.constant dense<0.000000e+00> : vector<128x128xf32>
    %3 = tpu.matmul %1, %2, %cst {dimension_numbers = #tpu.dot_dimension_numbers<[1], [0], [0], [1], [0, 0, 1, 1], [], []>} : vector<128x256xbf16>, vector<256x128xbf16>, vector<128x128xf32> -> vector<128x128xf32>
    %c0_3 = arith.constant 0 : index
    %c0_4 = arith.constant 0 : index
    %4 = vector.load %arg4[%c0_3, %c0_4] : memref<1x128xf32, #tpu.memory_space<vmem>>, vector<1x128xf32>
    %5 = vector.broadcast %4 : vector<1x128xf32> to vector<128x128xf32>
    %6 = arith.addf %3, %5 : vector<128x128xf32>
    %7 = math.tanh %6 : vector<128x128xf32>
    %c0_5 = arith.constant 0 : index
    %c0_6 = arith.constant 0 : index
    %8 = vector.load %arg5[%c0_5, %c0_6] : memref<128x128xf32, #tpu.memory_space<vmem>>, vector<128x128xf32>
    tpu.vector_store %arg5[%c0_5, %c0_6], %7 {strides = array<i32>} : memref<128x128xf32, #tpu.memory_space<vmem>>, vector<128x128xf32>,
    return
  }
  func.func @transform_0(%arg0: i32, %arg1: i32) -> (i32, i32) {
    %c0_i32 = arith.constant 0 : i32
    %c0_i32_0 = arith.constant 0 : i32
    return %arg0, %c0_i32 : i32, i32
  }
  func.func @transform_1(%arg0: i32, %arg1: i32) -> (i32, i32) {
    %c0_i32 = arith.constant 0 : i32
    %c0_i32_0 = arith.constant 0 : i32
    return %c0_i32, %arg1 : i32, i32
  }
  func.func @transform_2(%arg0: i32, %arg1: i32) -> (i32, i32) {
    %c0_i32 = arith.constant 0 : i32
    %c0_i32_0 = arith.constant 0 : i32
    return %c0_i32, %arg1 : i32, i32
  }
  func.func @transform_3(%arg0: i32, %arg1: i32) -> (i32, i32) {
    %c0_i32 = arith.constant 0 : i32
    return %arg0, %arg1 : i32, i32
  }
}

</mosaic_0001>

<llo_original>
// kernel: instrument_backbone_enc.1
$region0: #{instrument_backbone_enc.1}
  #allocation0 [shape = 'u32[]', space=smem, size = 0x4, offset = 0x4, fixed_abs, tag = 'smem constant byte address 0x4 - core index']
  #allocation1 [shape = 'u32[144,128]{1,0:T(1,128)}', space=vmem, size = 0x12000, scoped, tag = 'internal scratch']
  %s0 = inlined_call_operand.vmem [shape: f32[128,256], index: 0, kind: input, shape index: {}]
  %s1 = inlined_call_operand.vmem [shape: bf16[256,128], index: 1, kind: input, shape index: {}]
  %s2 = inlined_call_operand.vmem [shape: f32[1,128], index: 2, kind: input, shape index: {}]
  %s3 = inlined_call_operand.hbm [shape: f32[128,128], index: 3, kind: output, shape index: {}]
  %s4 = sld [smem:[#allocation0]]
  $region22: #{instrument_backbone_enc.1} parent=0
    _
  %s6 = ssub.s32 1, %s4
  %s7 = scalar_select 0, %s6, %s4
  $region1: #{instrument_backbone_enc.1} parent=0
    #allocation2 [shape = 'u8[65536]{0}', space=vmem, size = 0x10000, scoped, tag = 'output window, operand 0, single buffered']
    #allocation3 [shape = 's32[1]{0}', space=sflag, size = 0x4, scoped, tag = 'scoped memory for instrument_backbone_enc.1']
    %8 = vsyncpa [#allocation3], 0
    // Predicated region
    $region2: #{instrument_backbone_enc.1} parent=1 // pred_check
      _
    $region3: #{instrument_backbone_enc.1} parent=1 // pred_check_branch
      %10 = sbr.rel (0) target = $region5
    $region4: #{instrument_backbone_enc.1} parent=1 // pred_region
      _
    $region5: #{instrument_backbone_enc.1} parent=1 // pred_fallthru
      _
    // Predicated region
    $region6: #{instrument_backbone_enc.1} parent=1 // pred_check
      _
    $region7: #{instrument_backbone_enc.1} parent=1 // pred_check_branch
      %12 = sbr.rel (0) target = $region9
    $region8: #{instrument_backbone_enc.1} parent=1 // pred_region
      _
    $region9: #{instrument_backbone_enc.1} parent=1 // pred_fallthru
      _
    // Predicated region
    $region10: #{instrument_backbone_enc.1} parent=1 // pred_check
      _
    $region11: #{instrument_backbone_enc.1} parent=1 // pred_check_branch
      %14 = sbr.rel (0) target = $region13
    $region12: #{instrument_backbone_enc.1} parent=1 // pred_region
      _
    $region13: #{instrument_backbone_enc.1} parent=1 // pred_fallthru
      _
    %v16 = vld [vmem:[%s0] sm:$0xff]
    %v17 = vld [vmem:[%s0 + $0x8] sm:$0xff]
    %v18 = vld [vmem:[%s0 + $0x10] sm:$0xff]
    %v19 = vld [vmem:[%s0 + $0x18] sm:$0xff]
    %v20 = vld [vmem:[%s0 + $0x20] sm:$0xff]
    %v21 = vld [vmem:[%s0 + $0x28] sm:$0xff]
    %v22 = vld [vmem:[%s0 + $0x30] sm:$0xff]
    %v23 = vld [vmem:[%s0 + $0x38] sm:$0xff]
    %v24 = vld [vmem:[%s0 + $0x40] sm:$0xff]
    %v25 = vld [vmem:[%s0 + $0x48] sm:$0xff]
    %v26 = vld [vmem:[%s0 + $0x50] sm:$0xff]
    %v27 = vld [vmem:[%s0 + $0x58] sm:$0xff]
    %v28 = vld [vmem:[%s0 + $0x60] sm:$0xff]
    %v29 = vld [vmem:[%s0 + $0x68] sm:$0xff]
    %v30 = vld [vmem:[%s0 + $0x70] sm:$0xff]
    %v31 = vld [vmem:[%s0 + $0x78] sm:$0xff]
    %v32 = vld [vmem:[%s0 + $0x80] sm:$0xff]
    %v33 = vld [vmem:[%s0 + $0x88] sm:$0xff]
    %v34 = vld [vmem:[%s0 + $0x90] sm:$0xff]
    %v35 = vld [vmem:[%s0 + $0x98] sm:$0xff]
    %v36 = vld [vmem:[%s0 + $0xa0] sm:$0xff]
    %v37 = vld [vmem:[%s0 + $0xa8] sm:$0xff]
    %v38 = vld [vmem:[%s0 + $0xb0] sm:$0xff]
    %v39 = vld [vmem:[%s0 + $0xb8] sm:$0xff]
    %v40 = vld [vmem:[%s0 + $0xc0] sm:$0xff]
    %v41 = vld [vmem:[%s0 + $0xc8] sm:$0xff]
    %v42 = vld [vmem:[%s0 + $0xd0] sm:$0xff]
    %v43 = vld [vmem:[%s0 + $0xd8] sm:$0xff]
    %v44 = vld [vmem:[%s0 + $0xe0] sm:$0xff]
    %v45 = vld [vmem:[%s0 + $0xe8] sm:$0xff]
    %v46 = vld [vmem:[%s0 + $0xf0] sm:$0xff]
    %v47 = vld [vmem:[%s0 + $0xf8] sm:$0xff]
    %v48 = vpack.c.bf16 %v18, %v16
    %v49 = vpack.c.bf16 %v19, %v17
    %v50 = vpack.c.bf16 %v22, %v20
    %v51 = vpack.c.bf16 %v23, %v21
    %v52 = vpack.c.bf16 %v26, %v24
    %v53 = vpack.c.bf16 %v27, %v25
    %v54 = vpack.c.bf16 %v30, %v28
    %v55 = vpack.c.bf16 %v31, %v29
    %v56 = vpack.c.bf16 %v34, %v32
    %v57 = vpack.c.bf16 %v35, %v33
    %v58 = vpack.c.bf16 %v38, %v36
    %v59 = vpack.c.bf16 %v39, %v37
    %v60 = vpack.c.bf16 %v42, %v40
    %v61 = vpack.c.bf16 %v43, %v41
    %v62 = vpack.c.bf16 %v46, %v44
    %v63 = vpack.c.bf16 %v47, %v45
    %v64 = vld [vmem:[%s1] sm:$0xf]
    %v65 = vld [vmem:[%s1 + $0x4] sm:$0xf]
    %v66 = vld [vmem:[%s1 + $0x8] sm:$0xf]
    %v67 = vld [vmem:[%s1 + $0xc] sm:$0xf]
    %v68 = vld [vmem:[%s1 + $0x10] sm:$0xf]
    %v69 = vld [vmem:[%s1 + $0x14] sm:$0xf]
    %v70 = vld [vmem:[%s1 + $0x18] sm:$0xf]
    %v71 = vld [vmem:[%s1 + $0x1c] sm:$0xf]
    %v72 = vld [vmem:[%s1 + $0x20] sm:$0xf]
    %v73 = vld [vmem:[%s1 + $0x24] sm:$0xf]
    %v74 = vld [vmem:[%s1 + $0x28] sm:$0xf]
    %v75 = vld [vmem:[%s1 + $0x2c] sm:$0xf]
    %v76 = vld [vmem:[%s1 + $0x30] sm:$0xf]
    %v77 = vld [vmem:[%s1 + $0x34] sm:$0xf]
    %v78 = vld [vmem:[%s1 + $0x38] sm:$0xf]
    %v79 = vld [vmem:[%s1 + $0x3c] sm:$0xf]
    %v80 = vld [vmem:[%s1 + $0x40] sm:$0xf]
    %v81 = vld [vmem:[%s1 + $0x44] sm:$0xf]
    %v82 = vld [vmem:[%s1 + $0x48] sm:$0xf]
    %v83 = vld [vmem:[%s1 + $0x4c] sm:$0xf]
    %v84 = vld [vmem:[%s1 + $0x50] sm:$0xf]
    %v85 = vld [vmem:[%s1 + $0x54] sm:$0xf]
    %v86 = vld [vmem:[%s1 + $0x58] sm:$0xf]
    %v87 = vld [vmem:[%s1 + $0x5c] sm:$0xf]
    %v88 = vld [vmem:[%s1 + $0x60] sm:$0xf]
    %v89 = vld [vmem:[%s1 + $0x64] sm:$0xf]
    %v90 = vld [vmem:[%s1 + $0x68] sm:$0xf]
    %v91 = vld [vmem:[%s1 + $0x6c] sm:$0xf]
    %v92 = vld [vmem:[%s1 + $0x70] sm:$0xf]
    %v93 = vld [vmem:[%s1 + $0x74] sm:$0xf]
    %v94 = vld [vmem:[%s1 + $0x78] sm:$0xf]
    %v95 = vld [vmem:[%s1 + $0x7c] sm:$0xf]
    %v96 = vld [vmem:[%s2] sm:$0x1]
    %v98 = vlaneseq
    %v99 = vshrl.u32 %v98, 7
    %v100 = vsub.s32 0, %v99
    %v101 = vrot.slane %v96, %v100
    %v135 = vunpack.c.l.b16 %v64
    %v136 = vunpack.c.l.b16 %v65
    %v137 = vunpack.c.l.b16 %v66
    %v138 = vunpack.c.l.b16 %v67
    %v139 = vunpack.c.l.b16 %v68
    %v140 = vunpack.c.l.b16 %v69
    %v141 = vunpack.c.l.b16 %v70
    %v142 = vunpack.c.l.b16 %v71
    %v143 = vunpack.c.l.b16 %v72
    %v144 = vunpack.c.l.b16 %v73
    %v145 = vunpack.c.l.b16 %v74
    %v146 = vunpack.c.l.b16 %v75
    %v147 = vunpack.c.l.b16 %v76
    %v148 = vunpack.c.l.b16 %v77
    %v149 = vunpack.c.l.b16 %v78
    %v150 = vunpack.c.l.b16 %v79
    %v151 = vunpack.c.l.b16 %v80
    %v152 = vunpack.c.l.b16 %v81
    %v153 = vunpack.c.l.b16 %v82
    %v154 = vunpack.c.l.b16 %v83
    %v155 = vunpack.c.l.b16 %v84
    %v156 = vunpack.c.l.b16 %v85
    %v157 = vunpack.c.l.b16 %v86
    %v158 = vunpack.c.l.b16 %v87
    %v159 = vunpack.c.l.b16 %v88
    %v160 = vunpack.c.l.b16 %v89
    %v161 = vunpack.c.l.b16 %v90
    %v162 = vunpack.c.l.b16 %v91
    %v163 = vunpack.c.l.b16 %v92
    %v164 = vunpack.c.l.b16 %v93
    %v165 = vunpack.c.l.b16 %v94
    %v166 = vunpack.c.l.b16 %v95
    %v167 = vpack.c.b16 %v136, %v135
    %v168 = vpack.c.b16 %v138, %v137
    %v169 = vpack.c.b16 %v140, %v139
    %v170 = vpack.c.b16 %v142, %v141
    %v171 = vpack.c.b16 %v144, %v143
    %v172 = vpack.c.b16 %v146, %v145
    %v173 = vpack.c.b16 %v148, %v147
    %v174 = vpack.c.b16 %v150, %v149
    %v175 = vpack.c.b16 %v152, %v151
    %v176 = vpack.c.b16 %v154, %v153
    %v177 = vpack.c.b16 %v156, %v155
    %v178 = vpack.c.b16 %v158, %v157
    %v179 = vpack.c.b16 %v160, %v159
    %v180 = vpack.c.b16 %v162, %v161
    %v181 = vpack.c.b16 %v164, %v163
    %v182 = vpack.c.b16 %v166, %v165
    %199 = vmatprep.subr.bf16.mxu0 0
    %200 = vmatpush1.bf16.msra.mxu0 %v167
    %201 = vmatprep.subr.bf16.mxu0 0
    %202 = vmatpush1.bf16.msra.mxu0 %v168
    %203 = vmatprep.subr.bf16.mxu0 0
    %204 = vmatpush1.bf16.msra.mxu0 %v169
    %205 = vmatprep.subr.bf16.mxu0 0
    %206 = vmatpush1.bf16.msra.mxu0 %v170
    %207 = vmatprep.subr.bf16.mxu0 0
    %208 = vmatpush1.bf16.msra.mxu0 %v171
    %209 = vmatprep.subr.bf16.mxu0 0
    %210 = vmatpush1.bf16.msra.mxu0 %v172
    %211 = vmatprep.subr.bf16.mxu0 0
    %212 = vmatpush1.bf16.msra.mxu0 %v173
    %213 = vmatprep.subr.bf16.mxu0 0
    %214 = vmatpush1.bf16.msra.mxu0 %v174
    %215 = vmatprep.subr.bf16.mxu0 0
    %216 = vmatpush1.bf16.msra.mxu0 %v175
    %217 = vmatprep.subr.bf16.mxu0 0
    %218 = vmatpush1.bf16.msra.mxu0 %v176
    %219 = vmatprep.subr.bf16.mxu0 0
    %220 = vmatpush1.bf16.msra.mxu0 %v177
    %221 = vmatprep.subr.bf16.mxu0 0
    %222 = vmatpush1.bf16.msra.mxu0 %v178
    %223 = vmatprep.subr.bf16.mxu0 0
    %224 = vmatpush1.bf16.msra.mxu0 %v179
    %225 = vmatprep.subr.bf16.mxu0 0
    %226 = vmatpush1.bf16.msra.mxu0 %v180
    %227 = vmatprep.subr.bf16.mxu0 0
    %228 = vmatpush1.bf16.msra.mxu0 %v181
    %229 = vmatprep.subr.bf16.mxu0 0
    %230 = vmatpush1.bf16.msra.mxu0 %v182
    %231 = vmatprep.mubr.bf16.mxu0 %v49
    %232 = vmatmul.mubr.bf16.gmra.mrb[0].mxu0 %v48
    %v233 = vpop.f32.mrb[0].mxu0
    %v234 = vadd.f32 %v101, %v233
    %v235 = vpop.f32.mrb[0].mxu0
    %v236 = vpop.f32.mrb[0].mxu0
    %v237 = vadd.f32 %v101, %v236
    %v238 = vpop.f32.mrb[0].mxu0
    %239 = vmatprep.mubr.bf16.mxu0 %v51
    %240 = vmatmul.mubr.bf16.gmra.mrb[0].mxu0 %v50
    %v241 = vpop.f32.mrb[0].mxu0
    %v242 = vadd.f32 %v101, %v241
    %v243 = vpop.f32.mrb[0].mxu0
    %v244 = vpop.f32.mrb[0].mxu0
    %v245 = vadd.f32 %v101, %v244
    %v246 = vpop.f32.mrb[0].mxu0
    %247 = vmatprep.mubr.bf16.mxu0 %v53
    %248 = vmatmul.mubr.bf16.gmra.mrb[0].mxu0 %v52
    %v249 = vpop.f32.mrb[0].mxu0
    %v250 = vadd.f32 %v101, %v249
    %v251 = vpop.f32.mrb[0].mxu0
    %v252 = vpop.f32.mrb[0].mxu0
    %v253 = vadd.f32 %v101, %v252
    %v254 = vpop.f32.mrb[0].mxu0
    %255 = vmatprep.mubr.bf16.mxu0 %v55
    %256 = vmatmul.mubr.bf16.gmra.mrb[0].mxu0 %v54
    %v257 = vpop.f32.mrb[0].mxu0
    %v258 = vadd.f32 %v101, %v257
    %v259 = vpop.f32.mrb[0].mxu0
    %v260 = vpop.f32.mrb[0].mxu0
    %v261 = vadd.f32 %v101, %v260
    %v262 = vpop.f32.mrb[0].mxu0
    %263 = vmatprep.mubr.bf16.mxu0 %v57
    %264 = vmatmul.mubr.bf16.gmra.mrb[0].mxu0 %v56
    %v265 = vpop.f32.mrb[0].mxu0
    %v266 = vadd.f32 %v101, %v265
    %v267 = vpop.f32.mrb[0].mxu0
    %v268 = vpop.f32.mrb[0].mxu0
    %v269 = vadd.f32 %v101, %v268
    %v270 = vpop.f32.mrb[0].mxu0
    %271 = vmatprep.mubr.bf16.mxu0 %v59
    %272 = vmatmul.mubr.bf16.gmra.mrb[0].mxu0 %v58
    %v273 = vpop.f32.mrb[0].mxu0
    %v274 = vadd.f32 %v101, %v273
    %v275 = vpop.f32.mrb[0].mxu0
    %v276 = vpop.f32.mrb[0].mxu0
    %v277 = vadd.f32 %v101, %v276
    %v278 = vpop.f32.mrb[0].mxu0
    %279 = vmatprep.mubr.bf16.mxu0 %v61
    %280 = vmatmul.mubr.bf16.gmra.mrb[0].mxu0 %v60
    %v281 = vpop.f32.mrb[0].mxu0
    %v282 = vadd.f32 %v101, %v281
    %v283 = vpop.f32.mrb[0].mxu0
    %v284 = vpop.f32.mrb[0].mxu0
    %v285 = vadd.f32 %v101, %v284
    %v286 = vpop.f32.mrb[0].mxu0
    %287 = vmatprep.mubr.bf16.mxu0 %v63
    %288 = vmatmul.mubr.bf16.gmra.mrb[0].mxu0 %v62
    %v289 = vpop.f32.mrb[0].mxu0
    %v290 = vadd.f32 %v101, %v289
    %v291 = vpop.f32.mrb[0].mxu0
    %v292 = vpop.f32.mrb[0].mxu0
    %v293 = vadd.f32 %v101, %v292
    %v294 = vpop.f32.mrb[0].mxu0
    %295 = vdwg.mxu0
    %v296 = vtanh.pop %v234
    %v297 = vtanh.pop %v237
    %v298 = vtanh.pop %v242
    %v299 = vtanh.pop %v245
    %v300 = vtanh.pop %v250
    %v301 = vtanh.pop %v253
    %v302 = vtanh.pop %v258
    %v303 = vtanh.pop %v261
    %v304 = vtanh.pop %v266
    %v305 = vtanh.pop %v269
    %v306 = vtanh.pop %v274
    %v307 = vtanh.pop %v277
    %v308 = vtanh.pop %v282
    %v309 = vtanh.pop %v285
    %v310 = vtanh.pop %v290
    %v311 = vtanh.pop %v293
    %312 = vst [vmem:[#allocation2] sm:$0xff] %v296
    %313 = vst [vmem:[#allocation2 + $0x8] sm:$0xff] %v297
    %314 = vst [vmem:[#allocation2 + $0x10] sm:$0xff] %v298
    %315 = vst [vmem:[#allocation2 + $0x18] sm:$0xff] %v299
    %316 = vst [vmem:[#allocation2 + $0x20] sm:$0xff] %v300
    %317 = vst [vmem:[#allocation2 + $0x28] sm:$0xff] %v301
    %318 = vst [vmem:[#allocation2 + $0x30] sm:$0xff] %v302
    %319 = vst [vmem:[#allocation2 + $0x38] sm:$0xff] %v303
    %320 = vst [vmem:[#allocation2 + $0x40] sm:$0xff] %v304
    %321 = vst [vmem:[#allocation2 + $0x48] sm:$0xff] %v305
    %322 = vst [vmem:[#allocation2 + $0x50] sm:$0xff] %v306
    %323 = vst [vmem:[#allocation2 + $0x58] sm:$0xff] %v307
    %324 = vst [vmem:[#allocation2 + $0x60] sm:$0xff] %v308
    %325 = vst [vmem:[#allocation2 + $0x68] sm:$0xff] %v309
    %326 = vst [vmem:[#allocation2 + $0x70] sm:$0xff] %v310
    %327 = vst [vmem:[#allocation2 + $0x78] sm:$0xff] %v311
    // Predicated region
    $region14: #{instrument_backbone_enc.1} parent=1 // pred_check
      _
    $region15: #{instrument_backbone_enc.1} parent=1 // pred_check_branch
      %329 = sbr.rel (0) target = $region17
    $region16: #{instrument_backbone_enc.1} parent=1 // pred_region
      %s331 = ssub.s32 2048, 2048
      %332 = vsyncadd [#allocation3], %s331
      %s333 = sshll.u32 [#allocation2], 4
      %s334 = int_to_ptr.vmem [resolvable:$true] %s333
      %339 = dma.vmem_to_hbm [thread:$0]  %s334, 2048, %s3, [#allocation3], 128, 128, 8
    $region17: #{instrument_backbone_enc.1} parent=1 // pred_fallthru
      _
    // Predicated region
    $region18: #{instrument_backbone_enc.1} parent=1 // pred_check
      _
    $region19: #{instrument_backbone_enc.1} parent=1 // pred_check_branch
      %341 = sbr.rel (0) target = $region21
    $region20: #{instrument_backbone_enc.1} parent=1 // pred_region
      %342 = dma.done [#allocation3], 2048
    $region21: #{instrument_backbone_enc.1} parent=1 // pred_fallthru
      _
    %343 = vsyncpa [#allocation3], 1

</llo_original>
